<compile_context>
chip_gen: v7x
topology: tpu7x:2x2x1
jax: 0.10.0
libtpu: 0.0.40
codegen_flags: <defaults>
</compile_context>

<pallas_src>
import jax
import jax.numpy as jnp
from jax import lax
from jax.experimental import pallas as pl
from jax.experimental.pallas import tpu as pltpu


_TM = 1024            # batch tile for the grid path (f32 rows, multiple of 8)
_GRIDLESS_MAX = 1024  # largest batch served by the single-block (no-grid) path


def _linear_kernel(x_ref, w_ref, b_ref, o_ref):
    # x_ref: (TM_or_B, 784), w_ref: (3, 784), b_ref: (1, 3), o_ref: (TM_or_B, 3)
    # Contract dim 1 of x with dim 1 of w -> (TM_or_B, 3); f32 accumulate on MXU.
    acc = lax.dot_general(
        x_ref[...], w_ref[...],
        dimension_numbers=(((1,), (1,)), ((), ())),
        preferred_element_type=jnp.float32,
    )
    o_ref[...] = (acc + b_ref[...]).astype(o_ref.dtype)


def _cost_estimate(batch, in_dim, out_dim):
    return pl.CostEstimate(
        flops=2 * batch * in_dim * out_dim,
        transcendentals=0,
        bytes_accessed=(batch * in_dim * 4        # x read
                        + batch * out_dim * 4     # out write
                        + out_dim * in_dim * 4    # weight read
                        + out_dim * 4),           # bias read
    )


def one_layer_network(x_nchw, weight, bias, *, gridless_max=_GRIDLESS_MAX,
                      tile_m=_TM):
    """Forward pass of OneLayerNetwork.

    x_nchw: (B, ...) with prod(...) == 784, float32
    weight: (3, 784) float32  (PyTorch Linear convention: out_features x in_features)
    bias:   (3,)    float32
    returns (B, 3) float32
    """
    B = x_nchw.shape[0]
    x = x_nchw.reshape(B, -1)      # glue: flatten, matches torch x.view(B, -1)
    b2 = bias.reshape(1, -1)       # keep 2D for TPU layout
    out_dim, in_dim = weight.shape
    ce = _cost_estimate(B, in_dim, out_dim)

    if B <= gridless_max:
        # Single block, no grid: the whole problem fits comfortably in VMEM,
        # the kernel is launch/DMA bound, and one big HBM DMA is the most
        # efficient way to bring x in.  (On v7x this runs on one TensorCore;
        # larger batches fall through to the parallel grid below.)
        return pl.pallas_call(
            _linear_kernel,
            out_shape=jax.ShapeDtypeStruct((B, out_dim), x.dtype),
            in_specs=[
                pl.BlockSpec(memory_space=pltpu.MemorySpace.VMEM),
                pl.BlockSpec(memory_space=pltpu.MemorySpace.VMEM),
                pl.BlockSpec(memory_space=pltpu.MemorySpace.VMEM),
            ],
            out_specs=pl.BlockSpec(memory_space=pltpu.MemorySpace.VMEM),
            cost_estimate=ce,
        )(x, weight, b2)

    # Batch-tiled path: Pallas double-buffers the x DMA behind the MXU; weight
    # and bias stay VMEM-resident across the grid (index_map -> (0, 0)); the
    # batch axis is "parallel" so v7x's two TensorCores split the tiles.
    # No padding: the ragged last block is handled by Pallas (partial reads
    # padded, OOB output rows dropped); rows are independent so this is safe.
    assert tile_m % 8 == 0, "batch tile must be a multiple of 8 sublanes"
    n_tiles = pl.cdiv(B, tile_m)

    return pl.pallas_call(
        _linear_kernel,
        out_shape=jax.ShapeDtypeStruct((B, out_dim), x.dtype),
        grid_spec=pltpu.PrefetchScalarGridSpec(
            num_scalar_prefetch=0,
            grid=(n_tiles,),
            in_specs=[
                pl.BlockSpec((tile_m, in_dim), lambda i: (i, 0)),
                pl.BlockSpec((out_dim, in_dim), lambda i: (0, 0)),
                pl.BlockSpec((1, out_dim), lambda i: (0, 0)),
            ],
            out_specs=pl.BlockSpec((tile_m, out_dim), lambda i: (i, 0)),
        ),
        compiler_params=pltpu.CompilerParams(
            dimension_semantics=("parallel",),
        ),
        cost_estimate=ce,
    )(x, weight, b2)


if __name__ == "__main__":
    key = jax.random.PRNGKey(0)
    k_x, k_w, k_b = jax.random.split(key, 3)

    B, C, H, W = 8, 1, 28, 28          # 1*28*28 = 784, matches Linear(784, 3)
    IN, OUT = 784, 3

    x = jax.random.normal(k_x, (B, C, H, W), dtype=jnp.float32)

    # Deterministic param init mimicking torch.nn.Linear: U(-1/sqrt(in), 1/sqrt(in))
    bound = 1.0 / jnp.sqrt(jnp.float32(IN))
    weight = jax.random.uniform(k_w, (OUT, IN), dtype=jnp.float32,
                                minval=-bound, maxval=bound)
    bias = jax.random.uniform(k_b, (OUT,), dtype=jnp.float32,
                              minval=-bound, maxval=bound)

    # Path 1: gridless small-batch fast path.
    out = one_layer_network(x, weight, bias)
    out = jax.block_until_ready(out)
    ref = x.reshape(B, -1) @ weight.T + bias
    assert out.shape == (B, OUT)
    assert jnp.allclose(out, ref, atol=1e-5, rtol=1e-5)

    # Path 2: exercise the tiled (grid) path at small scale, including the
    # ragged last block (B=10, tile=8 -> 2 tiles, last tile has 2 valid rows).
    B2 = 10
    x2 = jax.random.normal(jax.random.PRNGKey(1), (B2, C, H, W),
                           dtype=jnp.float32)
    out2 = one_layer_network(x2, weight, bias, gridless_max=4, tile_m=8)
    out2 = jax.block_until_ready(out2)
    ref2 = x2.reshape(B2, -1) @ weight.T + bias
    assert out2.shape == (B2, OUT)
    assert jnp.allclose(out2, ref2, atol=1e-5, rtol=1e-5)

    print("KERNEL_OK")
</pallas_src>

<mosaic_0001>
module attributes {stable_mosaic.version = 11 : i64} {
  func.func @_linear_kernel(%arg0: memref<8x784xf32, #tpu.memory_space<vmem>>, %arg1: memref<3x784xf32, #tpu.memory_space<vmem>>, %arg2: memref<1x3xf32, #tpu.memory_space<vmem>>, %arg3: memref<8x3xf32, #tpu.memory_space<vmem>>) attributes {dimension_semantics = [], scalar_prefetch = 0 : i64, scratch_operands = 0 : i64, tpu.core_type = #tpu.core_type<tc>} {
    %c0 = arith.constant 0 : index
    %c0_0 = arith.constant 0 : index
    %0 = vector.load %arg0[%c0, %c0_0] : memref<8x784xf32, #tpu.memory_space<vmem>>, vector<8x784xf32>
    %c0_1 = arith.constant 0 : index
    %c0_2 = arith.constant 0 : index
    %1 = vector.load %arg1[%c0_1, %c0_2] : memref<3x784xf32, #tpu.memory_space<vmem>>, vector<3x784xf32>
    %cst = arith.constant dense<0.000000e+00> : vector<8x3xf32>
    %2 = tpu.matmul %0, %1, %cst {dimension_numbers = #tpu.dot_dimension_numbers<[1], [1], [0], [0], [0, 0, 1, 0], [], []>} : vector<8x784xf32>, vector<3x784xf32>, vector<8x3xf32> -> vector<8x3xf32>
    %c0_3 = arith.constant 0 : index
    %c0_4 = arith.constant 0 : index
    %3 = vector.load %arg2[%c0_3, %c0_4] : memref<1x3xf32, #tpu.memory_space<vmem>>, vector<1x3xf32>
    %4 = vector.broadcast %3 : vector<1x3xf32> to vector<8x3xf32>
    %5 = arith.addf %2, %4 : vector<8x3xf32>
    %c0_5 = arith.constant 0 : index
    %c0_6 = arith.constant 0 : index
    %6 = vector.load %arg3[%c0_5, %c0_6] : memref<8x3xf32, #tpu.memory_space<vmem>>, vector<8x3xf32>
    tpu.vector_store %arg3[%c0_5, %c0_6], %5 {strides = array<i32>} : memref<8x3xf32, #tpu.memory_space<vmem>>, vector<8x3xf32>,
    return
  }
}

</mosaic_0001>

<llo_original>
// kernel: tpu_custom_call.1
$region0: #{tpu_custom_call.1}
  #allocation0 [shape = 'u32[]', space=smem, size = 0x4, offset = 0x4, fixed_abs, tag = 'smem constant byte address 0x4 - core index']
  #allocation1 [shape = 'u32[144,128]{1,0:T(1,128)}', space=vmem, size = 0x12000, scoped, tag = 'internal scratch']
  %s0 = inlined_call_operand.hbm [shape: f32[8,784], index: 0, kind: input, shape index: {}]
  %s1 = inlined_call_operand.hbm [shape: f32[3,784], index: 1, kind: input, shape index: {}]
  %s2 = inlined_call_operand.vmem [shape: f32[1,3], index: 2, kind: input, shape index: {}]
  %s3 = inlined_call_operand.vmem [shape: f32[8,3], index: 3, kind: output, shape index: {}]
  %s4 = sld [smem:[#allocation0]]
  $region30: #{tpu_custom_call.1} parent=0
    _
  %s6 = ssub.s32 1, %s4
  %s7 = scalar_select 0, %s6, %s4
  $region1: #{tpu_custom_call.1} parent=0
    #allocation2 [shape = 'u8[28672]{0}', space=vmem, size = 0x7000, scoped, tag = 'input window, operand 0, single buffered']
    #allocation3 [shape = 's32[1]{0}', space=sflag, size = 0x4, scoped, tag = 'scoped memory for tpu_custom_call.1']
    #allocation4 [shape = 'u8[14336]{0}', space=vmem, size = 0x3800, scoped, tag = 'input window, operand 1, single buffered']
    #allocation5 [shape = 's32[1]{0}', space=sflag, size = 0x4, scoped, tag = 'scoped memory for tpu_custom_call.1']
    %8 = vsyncpa [#allocation3], 0
    %9 = vsyncpa [#allocation5], 0
    // Predicated region
    $region2: #{tpu_custom_call.1} parent=1 // pred_check
      _
    $region3: #{tpu_custom_call.1} parent=1 // pred_check_branch
      %11 = sbr.rel (0) target = $region5
    $region4: #{tpu_custom_call.1} parent=1 // pred_region
      %s13 = ssub.s32 896, 896
      %14 = vsyncadd [#allocation3], %s13
      %s16 = sshll.u32 [#allocation2], 4
      %s17 = int_to_ptr.vmem [resolvable:$true] %s16
      %19 = dma.hbm_to_vmem [thread:$0]  %s0, 896, %s17, [#allocation3]
    $region5: #{tpu_custom_call.1} parent=1 // pred_fallthru
      _
    // Predicated region
    $region6: #{tpu_custom_call.1} parent=1 // pred_check
      _
    $region7: #{tpu_custom_call.1} parent=1 // pred_check_branch
      %21 = sbr.rel (0) target = $region9
    $region8: #{tpu_custom_call.1} parent=1 // pred_region
      %s23 = ssub.s32 448, 448
      %24 = vsyncadd [#allocation5], %s23
      %s26 = sshll.u32 [#allocation4], 4
      %s27 = int_to_ptr.vmem [resolvable:$true] %s26
      %29 = dma.hbm_to_vmem [thread:$0]  %s1, 448, %s27, [#allocation5]
    $region9: #{tpu_custom_call.1} parent=1 // pred_fallthru
      _
    // Predicated region
    $region10: #{tpu_custom_call.1} parent=1 // pred_check
      _
    $region11: #{tpu_custom_call.1} parent=1 // pred_check_branch
      %31 = sbr.rel (0) target = $region13
    $region12: #{tpu_custom_call.1} parent=1 // pred_region
      _
    $region13: #{tpu_custom_call.1} parent=1 // pred_fallthru
      _
    // Predicated region
    $region14: #{tpu_custom_call.1} parent=1 // pred_check
      _
    $region15: #{tpu_custom_call.1} parent=1 // pred_check_branch
      %33 = sbr.rel (0) target = $region17
    $region16: #{tpu_custom_call.1} parent=1 // pred_region
      %34 = dma.done [#allocation3], 896
    $region17: #{tpu_custom_call.1} parent=1 // pred_fallthru
      _
    // Predicated region
    $region18: #{tpu_custom_call.1} parent=1 // pred_check
      _
    $region19: #{tpu_custom_call.1} parent=1 // pred_check_branch
      %36 = sbr.rel (0) target = $region21
    $region20: #{tpu_custom_call.1} parent=1 // pred_region
      %37 = dma.done [#allocation5], 448
    $region21: #{tpu_custom_call.1} parent=1 // pred_fallthru
      _
    %v38 = vld [vmem:[#allocation2] sm:$0xff]
    %v39 = vld [vmem:[#allocation2 + $0x8] sm:$0xff]
    %v40 = vld [vmem:[#allocation2 + $0x10] sm:$0xff]
    %v41 = vld [vmem:[#allocation2 + $0x18] sm:$0xff]
    %v42 = vld [vmem:[#allocation2 + $0x20] sm:$0xff]
    %v43 = vld [vmem:[#allocation2 + $0x28] sm:$0xff]
    %v44 = vld [vmem:[#allocation2 + $0x30] sm:$0xff]
    %v45 = vld [vmem:[#allocation4] sm:$0x77]
    %v46 = vld [vmem:[#allocation4 + $0x8] sm:$0x77]
    %v47 = vld [vmem:[#allocation4 + $0x10] sm:$0x77]
    %v48 = vld [vmem:[#allocation4 + $0x18] sm:$0x7]
    %v49 = vld [vmem:[%s2] sm:$0x1]
    %v51 = vlaneseq
    %v52 = vshrl.u32 %v51, 7
    %v53 = vsub.s32 0, %v52
    %v54 = vrot.slane %v49, %v53
    %v60 = vcombine.high %v45, %v45
    %v61 = vcombine.high %v46, %v46
    %v62 = vcombine.high %v47, %v47
    %vm66 = vcmask 130048
    %v68 = vsel %vm66, %v44, 0
    %v70 = vsel %vm66, %v48, 0
    %72 = vmatprep.subr.mxu0 %v60
    %73 = vmatpush1.xpose.msra.mxu0 %v45
    %74 = vmatprep.subr.mxu0 0.0
    %75 = vmatpush1.xpose.msra.mxu0 0.0
    %76 = vmatprep.subr.mxu0 0.0
    %77 = vmatpush1.xpose.msra.mxu0 0.0
    %78 = vmatprep.subr.mxu0 0.0
    %79 = vmatpush1.xpose.msra.mxu0 0.0
    %80 = vmatprep.subr.mxu0 0.0
    %81 = vmatpush1.xpose.msra.mxu0 0.0
    %82 = vmatprep.subr.mxu0 0.0
    %83 = vmatpush1.xpose.msra.mxu0 0.0
    %84 = vmatprep.subr.mxu0 0.0
    %85 = vmatpush1.xpose.msra.mxu0 0.0
    %86 = vmatprep.subr.mxu0 0.0
    %87 = vmatpush1.xpose.msra.mxu0 0.0
    %88 = vmatprep.subr.mxu0 0.0
    %89 = vmatpush1.xpose.msra.mxu0 0.0
    %90 = vmatprep.subr.mxu0 0.0
    %91 = vmatpush1.xpose.msra.mxu0 0.0
    %92 = vmatprep.subr.mxu0 0.0
    %93 = vmatpush1.xpose.msra.mxu0 0.0
    %94 = vmatprep.subr.mxu0 0.0
    %95 = vmatpush1.xpose.msra.mxu0 0.0
    %96 = vmatprep.subr.mxu0 0.0
    %97 = vmatpush1.xpose.msra.mxu0 0.0
    %98 = vmatprep.subr.mxu0 0.0
    %99 = vmatpush1.xpose.msra.mxu0 0.0
    %100 = vmatprep.subr.mxu0 0.0
    %101 = vmatpush1.xpose.msra.mxu0 0.0
    %102 = vmatprep.subr.mxu0 0.0
    %103 = vmatpush1.xpose.msra.mxu0 0.0
    %104 = vmatprep.subr.mxu0 0.0
    %105 = vmatpush1.xpose.msra.mxu0 0.0
    %106 = vmatprep.subr.mxu0 0.0
    %107 = vmatpush1.xpose.msra.mxu0 0.0
    %108 = vmatprep.subr.mxu0 0.0
    %109 = vmatpush1.xpose.msra.mxu0 0.0
    %110 = vmatprep.subr.mxu0 0.0
    %111 = vmatpush1.xpose.msra.mxu0 0.0
    %112 = vmatprep.subr.mxu0 0.0
    %113 = vmatpush1.xpose.msra.mxu0 0.0
    %114 = vmatprep.subr.mxu0 0.0
    %115 = vmatpush1.xpose.msra.mxu0 0.0
    %116 = vmatprep.subr.mxu0 0.0
    %117 = vmatpush1.xpose.msra.mxu0 0.0
    %118 = vmatprep.subr.mxu0 0.0
    %119 = vmatpush1.xpose.msra.mxu0 0.0
    %120 = vmatprep.subr.mxu0 0.0
    %121 = vmatpush1.xpose.msra.mxu0 0.0
    %122 = vmatprep.subr.mxu0 0.0
    %123 = vmatpush1.xpose.msra.mxu0 0.0
    %124 = vmatprep.subr.mxu0 0.0
    %125 = vmatpush1.xpose.msra.mxu0 0.0
    %126 = vmatprep.subr.mxu0 0.0
    %127 = vmatpush1.xpose.msra.mxu0 0.0
    %128 = vmatprep.subr.mxu0 0.0
    %129 = vmatpush1.xpose.msra.mxu0 0.0
    %130 = vmatprep.subr.mxu0 0.0
    %131 = vmatpush1.xpose.msra.mxu0 0.0
    %132 = vmatprep.subr.mxu0 0.0
    %133 = vmatpush1.xpose.msra.mxu0 0.0
    %134 = vmatprep.subr.mxu0 0.0
    %135 = vmatpush1.xpose.msra.mxu0 0.0
    %136 = vmatprep.mubr.f32.mxu0 %v39
    %137 = vmatmul.mubr.f32.gmra.mrb[0].mxu0 %v38
    %v138 = vpop.f32.mrb[0].mxu0
    %v139 = vadd.f32 %v54, %v138
    %v140 = vpop.f32.mrb[0].mxu0
    %141 = vdwg.mxu0
    %142 = vmatprep.subr.mxu0 %v61
    %143 = vmatpush1.xpose.msra.mxu0 %v46
    %144 = vmatprep.subr.mxu0 0.0
    %145 = vmatpush1.xpose.msra.mxu0 0.0
    %146 = vmatprep.subr.mxu0 0.0
    %147 = vmatpush1.xpose.msra.mxu0 0.0
    %148 = vmatprep.subr.mxu0 0.0
    %149 = vmatpush1.xpose.msra.mxu0 0.0
    %150 = vmatprep.subr.mxu0 0.0
    %151 = vmatpush1.xpose.msra.mxu0 0.0
    %152 = vmatprep.subr.mxu0 0.0
    %153 = vmatpush1.xpose.msra.mxu0 0.0
    %154 = vmatprep.subr.mxu0 0.0
    %155 = vmatpush1.xpose.msra.mxu0 0.0
    %156 = vmatprep.subr.mxu0 0.0
    %157 = vmatpush1.xpose.msra.mxu0 0.0
    %158 = vmatprep.subr.mxu0 0.0
    %159 = vmatpush1.xpose.msra.mxu0 0.0
    %160 = vmatprep.subr.mxu0 0.0
    %161 = vmatpush1.xpose.msra.mxu0 0.0
    %162 = vmatprep.subr.mxu0 0.0
    %163 = vmatpush1.xpose.msra.mxu0 0.0
    %164 = vmatprep.subr.mxu0 0.0
    %165 = vmatpush1.xpose.msra.mxu0 0.0
    %166 = vmatprep.subr.mxu0 0.0
    %167 = vmatpush1.xpose.msra.mxu0 0.0
    %168 = vmatprep.subr.mxu0 0.0
    %169 = vmatpush1.xpose.msra.mxu0 0.0
    %170 = vmatprep.subr.mxu0 0.0
    %171 = vmatpush1.xpose.msra.mxu0 0.0
    %172 = vmatprep.subr.mxu0 0.0
    %173 = vmatpush1.xpose.msra.mxu0 0.0
    %174 = vmatprep.subr.mxu0 0.0
    %175 = vmatpush1.xpose.msra.mxu0 0.0
    %176 = vmatprep.subr.mxu0 0.0
    %177 = vmatpush1.xpose.msra.mxu0 0.0
    %178 = vmatprep.subr.mxu0 0.0
    %179 = vmatpush1.xpose.msra.mxu0 0.0
    %180 = vmatprep.subr.mxu0 0.0
    %181 = vmatpush1.xpose.msra.mxu0 0.0
    %182 = vmatprep.subr.mxu0 0.0
    %183 = vmatpush1.xpose.msra.mxu0 0.0
    %184 = vmatprep.subr.mxu0 0.0
    %185 = vmatpush1.xpose.msra.mxu0 0.0
    %186 = vmatprep.subr.mxu0 0.0
    %187 = vmatpush1.xpose.msra.mxu0 0.0
    %188 = vmatprep.subr.mxu0 0.0
    %189 = vmatpush1.xpose.msra.mxu0 0.0
    %190 = vmatprep.subr.mxu0 0.0
    %191 = vmatpush1.xpose.msra.mxu0 0.0
    %192 = vmatprep.subr.mxu0 0.0
    %193 = vmatpush1.xpose.msra.mxu0 0.0
    %194 = vmatprep.subr.mxu0 0.0
    %195 = vmatpush1.xpose.msra.mxu0 0.0
    %196 = vmatprep.subr.mxu0 0.0
    %197 = vmatpush1.xpose.msra.mxu0 0.0
    %198 = vmatprep.subr.mxu0 0.0
    %199 = vmatpush1.xpose.msra.mxu0 0.0
    %200 = vmatprep.subr.mxu0 0.0
    %201 = vmatpush1.xpose.msra.mxu0 0.0
    %202 = vmatprep.subr.mxu0 0.0
    %203 = vmatpush1.xpose.msra.mxu0 0.0
    %204 = vmatprep.subr.mxu0 0.0
    %205 = vmatpush1.xpose.msra.mxu0 0.0
    %206 = vmatprep.mubr.f32.mxu0 %v41
    %207 = vmatmul.mubr.f32.gmra.mrb[0].mxu0 %v40
    %v208 = vpop.f32.mrb[0].mxu0
    %v209 = vadd.f32 %v139, %v208
    %v210 = vpop.f32.mrb[0].mxu0
    %211 = vdwg.mxu0
    %212 = vmatprep.subr.mxu0 %v62
    %213 = vmatpush1.xpose.msra.mxu0 %v47
    %214 = vmatprep.subr.mxu0 0.0
    %215 = vmatpush1.xpose.msra.mxu0 0.0
    %216 = vmatprep.subr.mxu0 0.0
    %217 = vmatpush1.xpose.msra.mxu0 0.0
    %218 = vmatprep.subr.mxu0 0.0
    %219 = vmatpush1.xpose.msra.mxu0 0.0
    %220 = vmatprep.subr.mxu0 0.0
    %221 = vmatpush1.xpose.msra.mxu0 0.0
    %222 = vmatprep.subr.mxu0 0.0
    %223 = vmatpush1.xpose.msra.mxu0 0.0
    %224 = vmatprep.subr.mxu0 0.0
    %225 = vmatpush1.xpose.msra.mxu0 0.0
    %226 = vmatprep.subr.mxu0 0.0
    %227 = vmatpush1.xpose.msra.mxu0 0.0
    %228 = vmatprep.subr.mxu0 0.0
    %229 = vmatpush1.xpose.msra.mxu0 0.0
    %230 = vmatprep.subr.mxu0 0.0
    %231 = vmatpush1.xpose.msra.mxu0 0.0
    %232 = vmatprep.subr.mxu0 0.0
    %233 = vmatpush1.xpose.msra.mxu0 0.0
    %234 = vmatprep.subr.mxu0 0.0
    %235 = vmatpush1.xpose.msra.mxu0 0.0
    %236 = vmatprep.subr.mxu0 0.0
    %237 = vmatpush1.xpose.msra.mxu0 0.0
    %238 = vmatprep.subr.mxu0 0.0
    %239 = vmatpush1.xpose.msra.mxu0 0.0
    %240 = vmatprep.subr.mxu0 0.0
    %241 = vmatpush1.xpose.msra.mxu0 0.0
    %242 = vmatprep.subr.mxu0 0.0
    %243 = vmatpush1.xpose.msra.mxu0 0.0
    %244 = vmatprep.subr.mxu0 0.0
    %245 = vmatpush1.xpose.msra.mxu0 0.0
    %246 = vmatprep.subr.mxu0 0.0
    %247 = vmatpush1.xpose.msra.mxu0 0.0
    %248 = vmatprep.subr.mxu0 0.0
    %249 = vmatpush1.xpose.msra.mxu0 0.0
    %250 = vmatprep.subr.mxu0 0.0
    %251 = vmatpush1.xpose.msra.mxu0 0.0
    %252 = vmatprep.subr.mxu0 0.0
    %253 = vmatpush1.xpose.msra.mxu0 0.0
    %254 = vmatprep.subr.mxu0 0.0
    %255 = vmatpush1.xpose.msra.mxu0 0.0
    %256 = vmatprep.subr.mxu0 0.0
    %257 = vmatpush1.xpose.msra.mxu0 0.0
    %258 = vmatprep.subr.mxu0 0.0
    %259 = vmatpush1.xpose.msra.mxu0 0.0
    %260 = vmatprep.subr.mxu0 0.0
    %261 = vmatpush1.xpose.msra.mxu0 0.0
    %262 = vmatprep.subr.mxu0 0.0
    %263 = vmatpush1.xpose.msra.mxu0 0.0
    %264 = vmatprep.subr.mxu0 0.0
    %265 = vmatpush1.xpose.msra.mxu0 0.0
    %266 = vmatprep.subr.mxu0 0.0
    %267 = vmatpush1.xpose.msra.mxu0 0.0
    %268 = vmatprep.subr.mxu0 0.0
    %269 = vmatpush1.xpose.msra.mxu0 0.0
    %270 = vmatprep.subr.mxu0 0.0
    %271 = vmatpush1.xpose.msra.mxu0 0.0
    %272 = vmatprep.subr.mxu0 0.0
    %273 = vmatpush1.xpose.msra.mxu0 0.0
    %274 = vmatprep.subr.mxu0 0.0
    %275 = vmatpush1.xpose.msra.mxu0 0.0
    %276 = vmatprep.mubr.f32.mxu0 %v43
    %277 = vmatmul.mubr.f32.gmra.mrb[0].mxu0 %v42
    %v278 = vpop.f32.mrb[0].mxu0
    %v279 = vadd.f32 %v209, %v278
    %v280 = vpop.f32.mrb[0].mxu0
    %281 = vdwg.mxu0
    %282 = vmatprep.subr.mxu0 0.0
    %283 = vmatpush1.xpose.msra.mxu0 %v70
    %284 = vmatprep.subr.mxu0 0.0
    %285 = vmatpush1.xpose.msra.mxu0 0.0
    %286 = vmatprep.subr.mxu0 0.0
    %287 = vmatpush1.xpose.msra.mxu0 0.0
    %288 = vmatprep.subr.mxu0 0.0
    %289 = vmatpush1.xpose.msra.mxu0 0.0
    %290 = vmatprep.subr.mxu0 0.0
    %291 = vmatpush1.xpose.msra.mxu0 0.0
    %292 = vmatprep.subr.mxu0 0.0
    %293 = vmatpush1.xpose.msra.mxu0 0.0
    %294 = vmatprep.subr.mxu0 0.0
    %295 = vmatpush1.xpose.msra.mxu0 0.0
    %296 = vmatprep.subr.mxu0 0.0
    %297 = vmatpush1.xpose.msra.mxu0 0.0
    %298 = vmatprep.subr.mxu0 0.0
    %299 = vmatpush1.xpose.msra.mxu0 0.0
    %300 = vmatprep.subr.mxu0 0.0
    %301 = vmatpush1.xpose.msra.mxu0 0.0
    %302 = vmatprep.subr.mxu0 0.0
    %303 = vmatpush1.xpose.msra.mxu0 0.0
    %304 = vmatprep.subr.mxu0 0.0
    %305 = vmatpush1.xpose.msra.mxu0 0.0
    %306 = vmatprep.subr.mxu0 0.0
    %307 = vmatpush1.xpose.msra.mxu0 0.0
    %308 = vmatprep.subr.mxu0 0.0
    %309 = vmatpush1.xpose.msra.mxu0 0.0
    %310 = vmatprep.subr.mxu0 0.0
    %311 = vmatpush1.xpose.msra.mxu0 0.0
    %312 = vmatprep.subr.mxu0 0.0
    %313 = vmatpush1.xpose.msra.mxu0 0.0
    %314 = vmatprep.subr.mxu0 0.0
    %315 = vmatpush1.xpose.msra.mxu0 0.0
    %316 = vmatprep.subr.mxu0 0.0
    %317 = vmatpush1.xpose.msra.mxu0 0.0
    %318 = vmatprep.subr.mxu0 0.0
    %319 = vmatpush1.xpose.msra.mxu0 0.0
    %320 = vmatprep.subr.mxu0 0.0
    %321 = vmatpush1.xpose.msra.mxu0 0.0
    %322 = vmatprep.subr.mxu0 0.0
    %323 = vmatpush1.xpose.msra.mxu0 0.0
    %324 = vmatprep.subr.mxu0 0.0
    %325 = vmatpush1.xpose.msra.mxu0 0.0
    %326 = vmatprep.subr.mxu0 0.0
    %327 = vmatpush1.xpose.msra.mxu0 0.0
    %328 = vmatprep.subr.mxu0 0.0
    %329 = vmatpush1.xpose.msra.mxu0 0.0
    %330 = vmatprep.subr.mxu0 0.0
    %331 = vmatpush1.xpose.msra.mxu0 0.0
    %332 = vmatprep.subr.mxu0 0.0
    %333 = vmatpush1.xpose.msra.mxu0 0.0
    %334 = vmatprep.subr.mxu0 0.0
    %335 = vmatpush1.xpose.msra.mxu0 0.0
    %336 = vmatprep.subr.mxu0 0.0
    %337 = vmatpush1.xpose.msra.mxu0 0.0
    %338 = vmatprep.subr.mxu0 0.0
    %339 = vmatpush1.xpose.msra.mxu0 0.0
    %340 = vmatprep.subr.mxu0 0.0
    %341 = vmatpush1.xpose.msra.mxu0 0.0
    %342 = vmatprep.subr.mxu0 0.0
    %343 = vmatpush1.xpose.msra.mxu0 0.0
    %344 = vmatprep.subr.mxu0 0.0
    %345 = vmatpush1.xpose.msra.mxu0 0.0
    %346 = vmatprep.mubr.f32.mxu0 0.0
    %347 = vmatmul.mubr.f32.gmra.mrb[0].mxu0 %v68
    %v348 = vpop.f32.mrb[0].mxu0
    %v349 = vadd.f32 %v279, %v348
    %v350 = vpop.f32.mrb[0].mxu0
    %351 = vdwg.mxu0
    %vm352 = vcmask 23552
    %353 = vst.msk [vmem:[%s3] sm:$0xff] %vm352, %v349
    // Predicated region
    $region22: #{tpu_custom_call.1} parent=1 // pred_check
      _
    $region23: #{tpu_custom_call.1} parent=1 // pred_check_branch
      %355 = sbr.rel (0) target = $region25
    $region24: #{tpu_custom_call.1} parent=1 // pred_region
      _
    $region25: #{tpu_custom_call.1} parent=1 // pred_fallthru
      _
    // Predicated region
    $region26: #{tpu_custom_call.1} parent=1 // pred_check
      _
    $region27: #{tpu_custom_call.1} parent=1 // pred_check_branch
      %357 = sbr.rel (0) target = $region29
    $region28: #{tpu_custom_call.1} parent=1 // pred_region
      _
    $region29: #{tpu_custom_call.1} parent=1 // pred_fallthru
      _
    %358 = vsyncpa [#allocation3], 1
    %359 = vsyncpa [#allocation5], 1

</llo_original>
